<compile_context>
chip_gen: v5e
topology: v5e:2x2
jax: 0.10.0
libtpu: 0.0.40
codegen_flags: <defaults>
</compile_context>

<pallas_src>
import jax
import jax.numpy as jnp
from jax.experimental import pallas as pl
from jax.experimental.pallas import tpu as pltpu

BN_EPS = 1e-5


def _global_pool_kernel(x_ref, gb_ref, o_ref):
    # x_ref : (N, TC, HW)  input block (native dtype)
    # gb_ref: (TC, 2)      packed [gamma | beta] (f32)
    # o_ref : (N, TC)      pooled output block (lane-dense channel axis)
    x = x_ref[...]
    n, tc, hw = x.shape
    # NOTE: these counts are only correct because the block spans the FULL
    # N and HW extents; never tile N or HW without reworking the statistics.
    inv_cnt = 1.0 / float(n * hw)
    inv_hw = 1.0 / float(hw)

    # ---- Pass 1: per-channel mean (f32 accumulation, cast streamed). ------
    s = jnp.sum(x.astype(jnp.float32), axis=0)        # (TC, HW)  VPU adds
    s = jnp.sum(s, axis=1, keepdims=True)             # (TC, 1)   XLU lane reduce
    mean = s * inv_cnt                                # (TC, 1)

    # ---- Pass 2: two-pass (centered) variance -- numerically robust vs the
    # one-pass E[x^2]-E[x]^2 form; block is VMEM-resident so this is free of
    # extra HBM traffic. BatchNorm2d(train) normalizes with biased variance.
    d = x.astype(jnp.float32) - mean                  # (N, TC, HW)
    ssq = jnp.sum(d * d, axis=0)                      # (TC, HW)
    ssq = jnp.sum(ssq, axis=1, keepdims=True)         # (TC, 1)
    var = ssq * inv_cnt
    inv_std = jax.lax.rsqrt(var + BN_EPS)             # (TC, 1)

    # Fold BN into a single per-channel scale / bias (kept on sublanes).
    gamma = gb_ref[:, 0:1]                            # (TC, 1)
    beta = gb_ref[:, 1:2]                             # (TC, 1)
    a = gamma * inv_std                               # (TC, 1)
    b = beta - a * mean                               # (TC, 1)

    # ---- Pass 3: apply relu(a*x + b) and pool over HW. --------------------
    # TODO(synk): on v6e/v7x a bf16 apply pass (cast a,b down once) would halve
    # the VALU ops/element for bf16 inputs; kept in f32 for v5e correctness.
    y = jnp.maximum(a * x.astype(jnp.float32) + b, 0.0)   # (N, TC, HW)
    pooled = jnp.sum(y, axis=2) * inv_hw                  # (N, TC) lane reduce
    o_ref[...] = pooled.astype(o_ref.dtype)


def _vmem_capacity_bytes():
    try:
        return int(pltpu.get_tpu_info().vmem_capacity_bytes)
    except Exception:
        return 64 << 20   # conservative: v7x physical VMEM per TensorCore


def _pick_channel_tile(n, c, hw, itemsize, target_block_bytes,
                       min_steps=4, min_block_bytes=1 << 20):
    """Channel tile size.

    Constraints:
      * the output block is (N, tc) with tc on the lane axis, so tc must be a
        multiple of 128 or equal to the full C extent (lane-dense unmasked
        stores + legal (8,128) block shape);
      * one input block (N, tc, HW) should stay under `target_block_bytes`
        (double-buffered by the pipeline);
      * when C allows, keep the grid at >= `min_steps` iterations so the
        channel axis pipelines and shards across both v7x TensorCores, as
        long as each block stays >= `min_block_bytes`.
    """
    if c % 128 != 0:
        # Full-C tile is the only legal lane-dense choice.
        # TODO(synk): two-phase HW-tiled accumulation fallback if this block
        # exceeds VMEM (enormous N*H*W with small, unaligned C).
        return c
    per_channel = n * hw * itemsize
    divisors = [t for t in range(128, c + 1, 128) if c % t == 0]
    fitting = [t for t in divisors if t * per_channel <= target_block_bytes]
    if not fitting:
        # Even a 128-channel block exceeds the target.
        # TODO(synk): two-phase HW-tiled accumulation for enormous N*H*W.
        return 128
    good = [t for t in fitting
            if c // t >= min_steps and t * per_channel >= min_block_bytes]
    if good:
        return max(good)
    return max(fitting)


def global_pool_forward(x, gamma, beta):
    """x: (N, C, H, W). gamma, beta: (C,). Returns (N, C, 1, 1).

    Matches nn.BatchNorm2d in training mode (batch statistics, biased
    variance) -> ReLU -> AvgPool2d(kernel_size=H).  For eval-mode BN the
    stats passes would be replaced by running_mean/running_var folded into
    the same (a, b) scale/bias.  The running-stat buffer updates themselves
    (a training side effect of the PyTorch module) are not emitted.
    """
    N, C, H, W = x.shape
    HW = H * W
    x3 = x.reshape(N, C, HW)
    # Single packed per-channel parameter block: column 0 = gamma, 1 = beta.
    gb = jnp.stack([gamma, beta], axis=1).astype(jnp.float32)   # (C, 2)

    vmem_cap = _vmem_capacity_bytes()
    # Per-input-buffer target: ~4-8 MiB depending on generation (v7x has half
    # the VMEM of v5e/v6e); leaves room for 2x double-buffering + f32 partials.
    target_block = max(1 << 20, min(8 << 20, vmem_cap // 16))
    tc = _pick_channel_tile(N, C, HW, x3.dtype.itemsize, target_block)
    grid = (C // tc,)

    out_nc = pl.pallas_call(
        _global_pool_kernel,
        out_shape=jax.ShapeDtypeStruct((N, C), x.dtype),
        grid=grid,
        in_specs=[
            # Full N and HW extents per tile, channel dim tiled by tc.
            pl.BlockSpec((N, tc, HW), lambda c: (0, c, 0)),
            pl.BlockSpec((tc, 2), lambda c: (c, 0)),
        ],
        out_specs=pl.BlockSpec((N, tc), lambda c: (0, c)),
        compiler_params=pltpu.CompilerParams(
            # Channel tiles are independent -> shard across TCs on v7x;
            # no-op on single-TC v5e/v6e.  Default Buffered(2) pipelining is
            # already enough to hide the block DMA for this mem-bound kernel.
            dimension_semantics=("parallel",),
            vmem_limit_bytes=min(int(vmem_cap * 3 // 4), 96 << 20),
        ),
    )(x3, gb)

    return out_nc.reshape(N, C, 1, 1)


def _reference(x, gamma, beta):
    # Pure-JAX reference mirroring nn.BatchNorm2d(train) -> relu -> AvgPool2d(H).
    mean = jnp.mean(x, axis=(0, 2, 3), keepdims=True)
    var = jnp.mean((x - mean) ** 2, axis=(0, 2, 3), keepdims=True)
    y = (x - mean) / jnp.sqrt(var + BN_EPS)
    y = y * gamma.reshape(1, -1, 1, 1) + beta.reshape(1, -1, 1, 1)
    y = jnp.maximum(y, 0.0)
    return jnp.mean(y, axis=(2, 3), keepdims=True)


if __name__ == "__main__":
    key = jax.random.PRNGKey(0)
    N, C, H, W = 2, 4, 16, 16  # input_size=16, input_channels=4

    kx, kg, kb = jax.random.split(key, 3)
    x = jax.random.normal(kx, (N, C, H, W), dtype=jnp.float32)
    # PyTorch inits gamma=1, beta=0; perturb slightly so the affine path is
    # actually exercised.
    gamma = jnp.ones((C,), jnp.float32) + 0.1 * jax.random.normal(kg, (C,))
    beta = 0.1 * jax.random.normal(kb, (C,))

    out = global_pool_forward(x, gamma, beta)
    out = jax.block_until_ready(out)
    ref = _reference(x, gamma, beta)
    assert out.shape == (N, C, 1, 1), out.shape
    assert jnp.allclose(out, ref, atol=1e-5, rtol=1e-5), (out, ref)

    # Secondary check: non-lane-aligned spatial extent (HW = 7*7 = 49) to
    # confirm the padded lanes of the full-extent last dim stay masked out of
    # the HW reductions.
    x2 = jax.random.normal(jax.random.PRNGKey(1), (N, C, 7, 7), dtype=jnp.float32)
    out2 = jax.block_until_ready(global_pool_forward(x2, gamma, beta))
    ref2 = _reference(x2, gamma, beta)
    assert jnp.allclose(out2, ref2, atol=1e-5, rtol=1e-5), (out2, ref2)

    print("KERNEL_OK")
</pallas_src>

<mosaic_0001>
module attributes {stable_mosaic.version = 11 : i64} {
  func.func @_global_pool_kernel(%arg0: i32, %arg1: memref<2x4x256xf32, #tpu.memory_space<vmem>>, %arg2: memref<4x2xf32, #tpu.memory_space<vmem>>, %arg3: memref<2x4xf32, #tpu.memory_space<vmem>>) attributes {dimension_semantics = [#tpu.dimension_semantics<parallel>], iteration_bounds = array<i64: 1>, scalar_prefetch = 0 : i64, scratch_operands = 0 : i64, tpu.core_type = #tpu.core_type<tc>, window_params = [{transform_indices = @transform_0, window_bounds = array<i64: 2, 4, 256>}, {transform_indices = @transform_1, window_bounds = array<i64: 4, 2>}, {transform_indices = @transform_2, window_bounds = array<i64: 2, 4>}]} {
    %c0 = arith.constant 0 : index
    %c0_0 = arith.constant 0 : index
    %c0_1 = arith.constant 0 : index
    %0 = vector.load %arg1[%c0, %c0_0, %c0_1] : memref<2x4x256xf32, #tpu.memory_space<vmem>>, vector<2x4x256xf32>
    %cst = arith.constant dense<0.000000e+00> : vector<4x256xf32>
    %1 = vector.multi_reduction <add>, %0, %cst [0] : vector<2x4x256xf32> to vector<4x256xf32>
    %cst_2 = arith.constant dense<0.000000e+00> : vector<4xf32>
    %2 = vector.multi_reduction <add>, %1, %cst_2 [1] : vector<4x256xf32> to vector<4xf32>
    %3 = vector.shape_cast %2 : vector<4xf32> to vector<4x1xf32>
    %cst_3 = arith.constant 0.001953125 : f32
    %4 = vector.broadcast %cst_3 : f32 to vector<4x1xf32>
    %5 = arith.mulf %3, %4 : vector<4x1xf32>
    %6 = vector.shape_cast %5 : vector<4x1xf32> to vector<1x4x1xf32>
    %7 = vector.broadcast %6 : vector<1x4x1xf32> to vector<2x4x256xf32>
    %8 = arith.subf %0, %7 : vector<2x4x256xf32>
    %9 = arith.mulf %8, %8 : vector<2x4x256xf32>
    %cst_4 = arith.constant dense<0.000000e+00> : vector<4x256xf32>
    %10 = vector.multi_reduction <add>, %9, %cst_4 [0] : vector<2x4x256xf32> to vector<4x256xf32>
    %cst_5 = arith.constant dense<0.000000e+00> : vector<4xf32>
    %11 = vector.multi_reduction <add>, %10, %cst_5 [1] : vector<4x256xf32> to vector<4xf32>
    %12 = vector.shape_cast %11 : vector<4xf32> to vector<4x1xf32>
    %cst_6 = arith.constant 0.001953125 : f32
    %13 = vector.broadcast %cst_6 : f32 to vector<4x1xf32>
    %14 = arith.mulf %12, %13 : vector<4x1xf32>
    %cst_7 = arith.constant 9.99999974E-6 : f32
    %15 = vector.broadcast %cst_7 : f32 to vector<4x1xf32>
    %16 = arith.addf %14, %15 : vector<4x1xf32>
    %17 = math.rsqrt %16 : vector<4x1xf32>
    %c0_8 = arith.constant 0 : index
    %c0_9 = arith.constant 0 : index
    %18 = vector.load %arg2[%c0_8, %c0_9] : memref<4x2xf32, #tpu.memory_space<vmem>>, vector<4x1xf32>
    %c0_10 = arith.constant 0 : index
    %c1 = arith.constant 1 : index
    %19 = vector.load %arg2[%c0_10, %c1] : memref<4x2xf32, #tpu.memory_space<vmem>>, vector<4x1xf32>
    %20 = arith.mulf %18, %17 : vector<4x1xf32>
    %21 = arith.mulf %20, %5 : vector<4x1xf32>
    %22 = arith.subf %19, %21 : vector<4x1xf32>
    %23 = vector.shape_cast %20 : vector<4x1xf32> to vector<1x4x1xf32>
    %24 = vector.broadcast %23 : vector<1x4x1xf32> to vector<2x4x256xf32>
    %25 = arith.mulf %24, %0 : vector<2x4x256xf32>
    %26 = vector.shape_cast %22 : vector<4x1xf32> to vector<1x4x1xf32>
    %27 = vector.broadcast %26 : vector<1x4x1xf32> to vector<2x4x256xf32>
    %28 = arith.addf %25, %27 : vector<2x4x256xf32>
    %cst_11 = arith.constant 0.000000e+00 : f32
    %29 = vector.broadcast %cst_11 : f32 to vector<2x4x256xf32>
    %30 = arith.maximumf %28, %29 : vector<2x4x256xf32>
    %cst_12 = arith.constant dense<0.000000e+00> : vector<2x4xf32>
    %31 = vector.multi_reduction <add>, %30, %cst_12 [2] : vector<2x4x256xf32> to vector<2x4xf32>
    %cst_13 = arith.constant 3.906250e-03 : f32
    %32 = vector.broadcast %cst_13 : f32 to vector<2x4xf32>
    %33 = arith.mulf %31, %32 : vector<2x4xf32>
    %c0_14 = arith.constant 0 : index
    %c0_15 = arith.constant 0 : index
    %34 = vector.load %arg3[%c0_14, %c0_15] : memref<2x4xf32, #tpu.memory_space<vmem>>, vector<2x4xf32>
    tpu.vector_store %arg3[%c0_14, %c0_15], %33 {strides = array<i32>} : memref<2x4xf32, #tpu.memory_space<vmem>>, vector<2x4xf32>,
    return
  }
  func.func @transform_0(%arg0: i32) -> (i32, i32, i32) {
    %c0_i32 = arith.constant 0 : i32
    %c0_i32_0 = arith.constant 0 : i32
    %c0_i32_1 = arith.constant 0 : i32
    return %c0_i32, %arg0, %c0_i32_0 : i32, i32, i32
  }
  func.func @transform_1(%arg0: i32) -> (i32, i32) {
    %c0_i32 = arith.constant 0 : i32
    %c0_i32_0 = arith.constant 0 : i32
    return %arg0, %c0_i32 : i32, i32
  }
  func.func @transform_2(%arg0: i32) -> (i32, i32) {
    %c0_i32 = arith.constant 0 : i32
    %c0_i32_0 = arith.constant 0 : i32
    return %c0_i32, %arg0 : i32, i32
  }
}

</mosaic_0001>

<llo_original>
// kernel: tpu_custom_call.1
$region0: #{tpu_custom_call.1}
  #allocation0 [shape = 'u32[]', space=smem, size = 0x4, offset = 0x4, fixed_abs, tag = 'smem constant byte address 0x4 - core index']
  #allocation1 [shape = 'u32[72,128]{1,0:T(1,128)}', space=vmem, size = 0x9000, scoped, tag = 'internal scratch']
  %s0 = inlined_call_operand.hbm [shape: f32[2,4,256], index: 0, kind: input, shape index: {}]
  %s1 = inlined_call_operand.vmem [shape: f32[4,2], index: 1, kind: input, shape index: {}]
  %s2 = inlined_call_operand.hbm [shape: f32[2,4], index: 2, kind: output, shape index: {}]
  %s3 = sld [smem:[#allocation0]]
  $region22: #{tpu_custom_call.1} parent=0
    _
  %s5 = ssub.s32 1, %s3
  %s6 = scalar_select 0, %s5, %s3
  $region1: #{tpu_custom_call.1} parent=0
    #allocation2 [shape = 'u8[8192]{0}', space=vmem, size = 0x2000, scoped, tag = 'input window, operand 0, single buffered']
    #allocation3 [shape = 's32[1]{0}', space=sflag, size = 0x4, scoped, tag = 'scoped memory for tpu_custom_call.1']
    #allocation4 [shape = 's32[1]{0}', space=sflag, size = 0x4, scoped, tag = 'scoped memory for tpu_custom_call.1']
    #allocation5 [shape = 'u8[1024]{0}', space=vmem, size = 0x400, scoped, tag = 'output window, operand 0, single buffered']
    %7 = vsyncpa [#allocation3], 0
    %8 = vsyncpa [#allocation4], 0
    // Predicated region
    $region2: #{tpu_custom_call.1} parent=1 // pred_check
      _
    $region3: #{tpu_custom_call.1} parent=1 // pred_check_branch
      %10 = sbr.rel (0) target = $region5
    $region4: #{tpu_custom_call.1} parent=1 // pred_region
      %12 = vsyncadd [#allocation3], 0
      %s13 = sshll.u32 %s0, 4
      %s14 = int_to_ptr.hbm [resolvable:$true] %s13
      %s15 = sshll.u32 [#allocation2], 4
      %s16 = int_to_ptr.vmem [resolvable:$true] %s15
      %21 = dma.hbm_to_vmem [thread:$0]  %s14, 256, %s16, [#allocation3], 128, 128, 8
    $region5: #{tpu_custom_call.1} parent=1 // pred_fallthru
      _
    // Predicated region
    $region6: #{tpu_custom_call.1} parent=1 // pred_check
      _
    $region7: #{tpu_custom_call.1} parent=1 // pred_check_branch
      %23 = sbr.rel (0) target = $region9
    $region8: #{tpu_custom_call.1} parent=1 // pred_region
      _
    $region9: #{tpu_custom_call.1} parent=1 // pred_fallthru
      _
    // Predicated region
    $region10: #{tpu_custom_call.1} parent=1 // pred_check
      _
    $region11: #{tpu_custom_call.1} parent=1 // pred_check_branch
      %25 = sbr.rel (0) target = $region13
    $region12: #{tpu_custom_call.1} parent=1 // pred_region
      %27 = dma.done [#allocation3], 256
    $region13: #{tpu_custom_call.1} parent=1 // pred_fallthru
      _
    %v28 = vld [vmem:[#allocation2] sm:$0xff]
    %v29 = vld [vmem:[#allocation2 + $0x8] sm:$0xff]
    %32 = vst [vmem:[#allocation1] ss:$2 sm:$0xff] %v28
    %v33 = vld.sshfl [vmem:[#allocation1] sm:$0xff pattern:$0x75316420]
    %v34 = vld.sshfl [vmem:[#allocation1 + $0x8] sm:$0xff pattern:$0x75316420]
    %s35 = scalar_lea.vmem [#allocation1], 16
    %36 = vst [vmem:[%s35] ss:$2 sm:$0xff] %v29
    %v37 = vld.sshfl [vmem:[#allocation1 + $0x10] sm:$0xff pattern:$0x75316420]
    %v38 = vld.sshfl [vmem:[#allocation1 + $0x18] sm:$0xff pattern:$0x75316420]
    %vm43 = vcmask 1043456
    %v44 = vsel %vm43, %v33, 0.0
    %v45 = vsel %vm43, %v37, 0.0
    %v46 = vadd.f32 %v44, %v45
    %v47 = vsel %vm43, %v34, 0.0
    %v48 = vsel %vm43, %v38, 0.0
    %v49 = vadd.f32 %v47, %v48
    %v50 = vsel %vm43, %v46, 0.0
    %v51 = vsel %vm43, %v49, 0.0
    %v52 = vadd.f32 %v50, %v51
    %53 = vadd.xlane.f32.xlu0 %v52
    %v54 = vpop.xlane.xlu0 %53
    %v55 = vmul.f32 %v54, 0.001953125
    %v58 = vunpack.c.l.s4 839922192
    %v59 = vunpack.c.0.s8 %v58
    %v60 = vperm.slane %v55, %v59
    %v62 = vsub.f32 %v28, %v60
    %v63 = vsub.f32 %v29, %v60
    %v64 = vmul.f32 %v62, %v62
    %v65 = vmul.f32 %v63, %v63
    %68 = vst [vmem:[#allocation1] ss:$2 sm:$0xff] %v64
    %v69 = vld.sshfl [vmem:[#allocation1] sm:$0xff pattern:$0x75316420]
    %v70 = vld.sshfl [vmem:[#allocation1 + $0x8] sm:$0xff pattern:$0x75316420]
    %s71 = scalar_lea.vmem [#allocation1], 16
    %72 = vst [vmem:[%s71] ss:$2 sm:$0xff] %v65
    %v73 = vld.sshfl [vmem:[#allocation1 + $0x10] sm:$0xff pattern:$0x75316420]
    %v74 = vld.sshfl [vmem:[#allocation1 + $0x18] sm:$0xff pattern:$0x75316420]
    %v79 = vsel %vm43, %v69, 0.0
    %v80 = vsel %vm43, %v73, 0.0
    %v81 = vadd.f32 %v79, %v80
    %v82 = vsel %vm43, %v70, 0.0
    %v83 = vsel %vm43, %v74, 0.0
    %v84 = vadd.f32 %v82, %v83
    %v85 = vsel %vm43, %v81, 0.0
    %v86 = vsel %vm43, %v84, 0.0
    %v87 = vadd.f32 %v85, %v86
    %88 = vadd.xlane.f32.xlu0 %v87
    %v89 = vpop.xlane.xlu0 %88
    %v90 = vmul.f32 %v89, 0.001953125
    %v91 = vadd.f32 %v90, 1e-05
    %v92 = vrsqrt.pop %v91
    %v93 = vmul.f32 %v92, %v91
    %v94 = vmul.f32 %v93, %v92
    %v95 = vmul.f32 0.5, %v94
    %v96 = vsub.f32 1.5, %v95
    %v97 = vmul.f32 %v92, %v96
    %vm98 = vweird.f32 %v91
    %vm99 = vweird.f32 %v92
    %vm100 = vmor %vm98, %vm99
    %v101 = vsel %vm100, %v92, %v97
    %v102 = vld [vmem:[%s1] sm:$0xf]
    %v103 = vmul.f32 %v102, %v101
    %v104 = vmul.f32 %v103, %v55
    %106 = vrot.lane.b32.xlu0 %v104, 1
    %v107 = vpop.permute.xlu0 %106
    %v109 = vsub.f32 %v102, %v107
    %111 = vset.pattern.permute.xlu0 0
    %112 = vperm.xlu0 %111, %v103
    %v113 = vpop.permute.xlu0 %112
    %115 = vst [vmem:[#allocation1] ss:$2 sm:$0xff] %v28
    %v116 = vld.sshfl [vmem:[#allocation1] sm:$0xff pattern:$0x75316420]
    %v117 = vld.sshfl [vmem:[#allocation1 + $0x8] sm:$0xff pattern:$0x75316420]
    %s118 = scalar_lea.vmem [#allocation1], 16
    %119 = vst [vmem:[%s118] ss:$2 sm:$0xff] %v29
    %v120 = vld.sshfl [vmem:[#allocation1 + $0x10] sm:$0xff pattern:$0x75316420]
    %v121 = vld.sshfl [vmem:[#allocation1 + $0x18] sm:$0xff pattern:$0x75316420]
    %v126 = vmul.f32 %v113, %v116
    %v127 = vmul.f32 %v113, %v117
    %v128 = vmul.f32 %v113, %v120
    %v129 = vmul.f32 %v113, %v121
    %131 = vset.pattern.permute.xlu0 1
    %132 = vperm.xlu0 %131, %v109
    %v133 = vpop.permute.xlu0 %132
    %v135 = vadd.f32 %v126, %v133
    %v136 = vadd.f32 %v127, %v133
    %v137 = vadd.f32 %v128, %v133
    %v138 = vadd.f32 %v129, %v133
    %v139 = vmax.f32 %v135, 0.0
    %v140 = vmax.f32 %v136, 0.0
    %v141 = vmax.f32 %v137, 0.0
    %v142 = vmax.f32 %v138, 0.0
    %v143 = vsel %vm43, %v139, 0.0
    %v144 = vsel %vm43, %v140, 0.0
    %v145 = vadd.f32 %v143, %v144
    %146 = vadd.xlane.f32.xlu0 %v145
    %v147 = vpop.xlane.xlu0 %146
    %v148 = vsel %vm43, %v141, 0.0
    %v149 = vsel %vm43, %v142, 0.0
    %v150 = vadd.f32 %v148, %v149
    %151 = vadd.xlane.f32.xlu0 %v150
    %v152 = vpop.xlane.xlu0 %151
    %v153 = vmul.f32 %v147, 0.00390625
    %v154 = vmul.f32 %v152, 0.00390625
    %v157 = vlaneseq
    %v158 = vand.u32 %v157, 127
    %v159 = vperm.slane %v153, %v158
    %v160 = vperm.slane %v154, %v158
    %vm161 = vcmask 1041409
    %v162 = vsel %vm161, %v160, %v159
    %vm164 = vcmask 25600
    %165 = vst.msk [vmem:[#allocation5] sm:$0x3] %vm164, %v162
    // Predicated region
    $region14: #{tpu_custom_call.1} parent=1 // pred_check
      _
    $region15: #{tpu_custom_call.1} parent=1 // pred_check_branch
      %167 = sbr.rel (0) target = $region17
    $region16: #{tpu_custom_call.1} parent=1 // pred_region
      %169 = vsyncadd [#allocation4], 0
      %s171 = sshll.u32 [#allocation5], 4
      %s172 = int_to_ptr.vmem [resolvable:$true] %s171
      %s173 = sshll.u32 %s2, 4
      %s174 = int_to_ptr.hbm [resolvable:$true] %s173
      %176 = dma.vmem_to_hbm [thread:$0]  %s172, 32, %s174, [#allocation4]
    $region17: #{tpu_custom_call.1} parent=1 // pred_fallthru
      _
    // Predicated region
    $region18: #{tpu_custom_call.1} parent=1 // pred_check
      _
    $region19: #{tpu_custom_call.1} parent=1 // pred_check_branch
      %178 = sbr.rel (0) target = $region21
    $region20: #{tpu_custom_call.1} parent=1 // pred_region
      %180 = dma.done [#allocation4], 32
    $region21: #{tpu_custom_call.1} parent=1 // pred_fallthru
      _
    %181 = vsyncpa [#allocation3], 1
    %182 = vsyncpa [#allocation4], 1

</llo_original>
